<compile_context>
chip_gen: v6e
topology: v6e:2x2x1
jax: 0.10.0
libtpu: 0.0.40
codegen_flags: <defaults>
</compile_context>

<pallas_src>
import functools

import jax
import jax.numpy as jnp
from jax.experimental import pallas as pl
from jax.experimental.pallas import tpu as pltpu


def _decoder_kernel(x_ref, w1_ref, b1_ref, w2_ref, b2_ref, w3_ref, b3_ref,
                    out_ref):
    """Fused 3-layer MLP: (relu o fc1) -> (relu o fc2) -> fc3."""
    x = x_ref[...]
    # fc1 -> ReLU   (cast LHS to the weight dtype -> bf16 MXU, f32 accumulate)
    h1 = jnp.dot(x.astype(w1_ref.dtype), w1_ref[...],
                 preferred_element_type=jnp.float32)
    h1 = jnp.maximum(h1 + b1_ref[...], 0.0)
    # fc2 -> ReLU
    h2 = jnp.dot(h1.astype(w2_ref.dtype), w2_ref[...],
                 preferred_element_type=jnp.float32)
    h2 = jnp.maximum(h2 + b2_ref[...], 0.0)
    # fc3 (no activation)
    out = jnp.dot(h2.astype(w3_ref.dtype), w3_ref[...],
                  preferred_element_type=jnp.float32)
    out_ref[...] = (out + b3_ref[...]).astype(out_ref.dtype)


@functools.partial(jax.jit, static_argnames=("seq_len", "input_size",
                                             "batch_tile"))
def linear_decoder_forward(x, params, *, seq_len, input_size, batch_tile=256):
    """x: (B, latent_dim) float32. Returns (B, seq_len, input_size) float32."""
    w1, b1, w2, b2, w3, b3 = params
    B, latent = x.shape
    out_dim = seq_len * input_size

    # Lane-dense output: pad fc3's output features up to a multiple of 128 so
    # the kernel's final store covers full lanes (unmasked vst). Padding is
    # cheap layout plumbing; the pad columns are sliced off after the call.
    out_pad = 128 * pl.cdiv(out_dim, 128)
    if out_pad != out_dim:
        w3 = jnp.pad(w3, ((0, 0), (0, out_pad - out_dim)))
        b3 = jnp.pad(b3, ((0, 0), (0, out_pad - out_dim)))

    vmem = pl.BlockSpec(memory_space=pltpu.MemorySpace.VMEM)

    if B <= batch_tile:
        # Single invocation, no grid: skips the pipeline prologue/epilogue that
        # a 1-step grid would pay. Everything lives in VMEM for the whole call.
        flat = pl.pallas_call(
            _decoder_kernel,
            out_shape=jax.ShapeDtypeStruct((B, out_pad), jnp.float32),
            in_specs=[vmem] * 7,
            out_specs=vmem,
        )(x, w1, b1, w2, b2, w3, b3)
        flat = flat[:, :out_dim]
    else:
        # Batch-tiled path: weights/biases are full-array blocks (VMEM-resident,
        # re-used every step); x / out are tiled over batch and auto
        # double-buffered. Batch axis is "parallel" -> sharded across v7x's two
        # TensorCores (no-op on v5e/v6e).
        tb = batch_tile
        nb = pl.cdiv(B, tb)
        b_padded = nb * tb
        if b_padded != B:
            x = jnp.pad(x, ((0, b_padded - B), (0, 0)))

        def full2(a):
            return pl.BlockSpec(a.shape, lambda i: (0, 0))

        flat = pl.pallas_call(
            _decoder_kernel,
            out_shape=jax.ShapeDtypeStruct((b_padded, out_pad), jnp.float32),
            grid=(nb,),
            in_specs=[
                pl.BlockSpec((tb, latent), lambda i: (i, 0)),
                full2(w1), full2(b1),
                full2(w2), full2(b2),
                full2(w3), full2(b3),
            ],
            out_specs=pl.BlockSpec((tb, out_pad), lambda i: (i, 0)),
            compiler_params=pltpu.CompilerParams(
                dimension_semantics=("parallel",),
                # Covers v5e's 16 MiB scoped default; well under v7x's 64 MiB
                # physical VMEM at these weight sizes.
                vmem_limit_bytes=32 * 1024 * 1024,
            ),
        )(x, w1, b1, w2, b2, w3, b3)
        flat = flat[:B, :out_dim]

    return flat.reshape(B, seq_len, input_size)


def init_params(key, latent_dim, hidden_size, seq_len, input_size):
    """Deterministic synthetic params. PyTorch Linear weight is (out, in); we
    store the transposed (in, out) layout. Weights in bf16 (halves weight DMA,
    native MXU dtype on all generations), biases in f32."""
    ks = jax.random.split(key, 6)

    def linear(kw, kb, fan_in, fan_out):
        bound = 1.0 / jnp.sqrt(fan_in)
        w = jax.random.uniform(kw, (fan_in, fan_out), jnp.float32,
                               minval=-bound, maxval=bound)
        b = jax.random.uniform(kb, (1, fan_out), jnp.float32,
                               minval=-bound, maxval=bound)
        return w.astype(jnp.bfloat16), b

    w1, b1 = linear(ks[0], ks[1], latent_dim, hidden_size)
    w2, b2 = linear(ks[2], ks[3], hidden_size, hidden_size)
    w3, b3 = linear(ks[4], ks[5], hidden_size, seq_len * input_size)
    return (w1, b1, w2, b2, w3, b3)


def _reference(x, params, seq_len, input_size):
    """Pure-JAX reference with the same math / dtypes as the kernel."""
    w1, b1, w2, b2, w3, b3 = params
    h = jnp.dot(x.astype(jnp.bfloat16), w1, preferred_element_type=jnp.float32)
    h = jnp.maximum(h + b1, 0.0)
    h = jnp.dot(h.astype(jnp.bfloat16), w2, preferred_element_type=jnp.float32)
    h = jnp.maximum(h + b2, 0.0)
    o = jnp.dot(h.astype(jnp.bfloat16), w3, preferred_element_type=jnp.float32)
    o = o + b3
    return o.reshape(-1, seq_len, input_size)


if __name__ == "__main__":
    # Small shapes consistent with the module's forward.
    B, latent_dim, hidden_size, seq_len, input_size = 2, 3, 32, 8, 2

    key = jax.random.PRNGKey(0)
    k_x, k_p, k_x2 = jax.random.split(key, 3)
    x = jax.random.normal(k_x, (B, latent_dim), jnp.float32)
    params = init_params(k_p, latent_dim, hidden_size, seq_len, input_size)

    # --- small-batch (grid-less) path ---
    out = linear_decoder_forward(x, params, seq_len=seq_len,
                                 input_size=input_size)
    jax.block_until_ready(out)
    ref = _reference(x, params, seq_len, input_size)
    assert out.shape == (B, seq_len, input_size)
    assert jnp.allclose(out, ref, atol=1e-2, rtol=1e-2), "small-batch mismatch"

    # --- batch-tiled path (exercises grid + parallel semantics + padding) ---
    B2 = 300
    x2 = jax.random.normal(k_x2, (B2, latent_dim), jnp.float32)
    out2 = linear_decoder_forward(x2, params, seq_len=seq_len,
                                  input_size=input_size, batch_tile=128)
    jax.block_until_ready(out2)
    ref2 = _reference(x2, params, seq_len, input_size)
    assert out2.shape == (B2, seq_len, input_size)
    assert jnp.allclose(out2, ref2, atol=1e-2, rtol=1e-2), "tiled-batch mismatch"

    print("KERNEL_OK")
</pallas_src>

<mosaic_0001>
module attributes {stable_mosaic.version = 11 : i64} {
  func.func @_decoder_kernel(%arg0: memref<2x3xf32, #tpu.memory_space<vmem>>, %arg1: memref<3x32xbf16, #tpu.memory_space<vmem>>, %arg2: memref<1x32xf32, #tpu.memory_space<vmem>>, %arg3: memref<32x32xbf16, #tpu.memory_space<vmem>>, %arg4: memref<1x32xf32, #tpu.memory_space<vmem>>, %arg5: memref<32x128xbf16, #tpu.memory_space<vmem>>, %arg6: memref<1x128xf32, #tpu.memory_space<vmem>>, %arg7: memref<2x128xf32, #tpu.memory_space<vmem>>) attributes {dimension_semantics = [], scalar_prefetch = 0 : i64, scratch_operands = 0 : i64, tpu.core_type = #tpu.core_type<tc>} {
    %c0 = arith.constant 0 : index
    %c0_0 = arith.constant 0 : index
    %0 = vector.load %arg0[%c0, %c0_0] : memref<2x3xf32, #tpu.memory_space<vmem>>, vector<2x3xf32>
    %1 = arith.truncf %0 : vector<2x3xf32> to vector<2x3xbf16>
    %c0_1 = arith.constant 0 : index
    %c0_2 = arith.constant 0 : index
    %2 = vector.load %arg1[%c0_1, %c0_2] : memref<3x32xbf16, #tpu.memory_space<vmem>>, vector<3x32xbf16>
    %cst = arith.constant dense<0.000000e+00> : vector<2x32xf32>
    %3 = tpu.matmul %1, %2, %cst {dimension_numbers = #tpu.dot_dimension_numbers<[1], [0], [0], [1], [0, 0, 1, 1], [], []>} : vector<2x3xbf16>, vector<3x32xbf16>, vector<2x32xf32> -> vector<2x32xf32>
    %c0_3 = arith.constant 0 : index
    %c0_4 = arith.constant 0 : index
    %4 = vector.load %arg2[%c0_3, %c0_4] : memref<1x32xf32, #tpu.memory_space<vmem>>, vector<1x32xf32>
    %5 = vector.broadcast %4 : vector<1x32xf32> to vector<2x32xf32>
    %6 = arith.addf %3, %5 : vector<2x32xf32>
    %cst_5 = arith.constant 0.000000e+00 : f32
    %7 = vector.broadcast %cst_5 : f32 to vector<2x32xf32>
    %8 = arith.maximumf %6, %7 : vector<2x32xf32>
    %9 = arith.truncf %8 : vector<2x32xf32> to vector<2x32xbf16>
    %c0_6 = arith.constant 0 : index
    %c0_7 = arith.constant 0 : index
    %10 = vector.load %arg3[%c0_6, %c0_7] : memref<32x32xbf16, #tpu.memory_space<vmem>>, vector<32x32xbf16>
    %cst_8 = arith.constant dense<0.000000e+00> : vector<2x32xf32>
    %11 = tpu.matmul %9, %10, %cst_8 {dimension_numbers = #tpu.dot_dimension_numbers<[1], [0], [0], [1], [0, 0, 1, 1], [], []>} : vector<2x32xbf16>, vector<32x32xbf16>, vector<2x32xf32> -> vector<2x32xf32>
    %c0_9 = arith.constant 0 : index
    %c0_10 = arith.constant 0 : index
    %12 = vector.load %arg4[%c0_9, %c0_10] : memref<1x32xf32, #tpu.memory_space<vmem>>, vector<1x32xf32>
    %13 = vector.broadcast %12 : vector<1x32xf32> to vector<2x32xf32>
    %14 = arith.addf %11, %13 : vector<2x32xf32>
    %cst_11 = arith.constant 0.000000e+00 : f32
    %15 = vector.broadcast %cst_11 : f32 to vector<2x32xf32>
    %16 = arith.maximumf %14, %15 : vector<2x32xf32>
    %17 = arith.truncf %16 : vector<2x32xf32> to vector<2x32xbf16>
    %c0_12 = arith.constant 0 : index
    %c0_13 = arith.constant 0 : index
    %18 = vector.load %arg5[%c0_12, %c0_13] : memref<32x128xbf16, #tpu.memory_space<vmem>>, vector<32x128xbf16>
    %cst_14 = arith.constant dense<0.000000e+00> : vector<2x128xf32>
    %19 = tpu.matmul %17, %18, %cst_14 {dimension_numbers = #tpu.dot_dimension_numbers<[1], [0], [0], [1], [0, 0, 1, 1], [], []>} : vector<2x32xbf16>, vector<32x128xbf16>, vector<2x128xf32> -> vector<2x128xf32>
    %c0_15 = arith.constant 0 : index
    %c0_16 = arith.constant 0 : index
    %20 = vector.load %arg6[%c0_15, %c0_16] : memref<1x128xf32, #tpu.memory_space<vmem>>, vector<1x128xf32>
    %21 = vector.broadcast %20 : vector<1x128xf32> to vector<2x128xf32>
    %22 = arith.addf %19, %21 : vector<2x128xf32>
    %c0_17 = arith.constant 0 : index
    %c0_18 = arith.constant 0 : index
    %23 = vector.load %arg7[%c0_17, %c0_18] : memref<2x128xf32, #tpu.memory_space<vmem>>, vector<2x128xf32>
    tpu.vector_store %arg7[%c0_17, %c0_18], %22 {strides = array<i32>} : memref<2x128xf32, #tpu.memory_space<vmem>>, vector<2x128xf32>,
    return
  }
}

</mosaic_0001>

<llo_original>
// kernel: linear_decoder_forward.1
$region0: #{linear_decoder_forward.1}
  #allocation0 [shape = 'u32[]', space=smem, size = 0x4, offset = 0x4, fixed_abs, tag = 'smem constant byte address 0x4 - core index']
  #allocation1 [shape = 'u32[144,128]{1,0:T(1,128)}', space=vmem, size = 0x12000, scoped, tag = 'internal scratch']
  %s0 = inlined_call_operand.vmem [shape: f32[2,3], index: 0, kind: input, shape index: {}]
  %s1 = inlined_call_operand.vmem [shape: bf16[3,32], index: 1, kind: input, shape index: {}]
  %s2 = inlined_call_operand.vmem [shape: f32[1,32], index: 2, kind: input, shape index: {}]
  %s3 = inlined_call_operand.vmem [shape: bf16[32,32], index: 3, kind: input, shape index: {}]
  %s4 = inlined_call_operand.vmem [shape: f32[1,32], index: 4, kind: input, shape index: {}]
  %s5 = inlined_call_operand.vmem [shape: bf16[32,128], index: 5, kind: input, shape index: {}]
  %s6 = inlined_call_operand.vmem [shape: f32[1,128], index: 6, kind: input, shape index: {}]
  %s7 = inlined_call_operand.vmem [shape: f32[2,128], index: 7, kind: output, shape index: {}]
  %s8 = sld [smem:[#allocation0]]
  $region38: #{linear_decoder_forward.1} parent=0
    _
  %s10 = ssub.s32 1, %s8
  %s11 = scalar_select 0, %s10, %s8
  // Predicated region
  $region2: #{linear_decoder_forward.1} parent=0 // pred_check
    _
  $region3: #{linear_decoder_forward.1} parent=0 // pred_check_branch
    %13 = sbr.rel (0) target = $region5
  $region4: #{linear_decoder_forward.1} parent=0 // pred_region
    _
  $region5: #{linear_decoder_forward.1} parent=0 // pred_fallthru
    _
  // Predicated region
  $region6: #{linear_decoder_forward.1} parent=0 // pred_check
    _
  $region7: #{linear_decoder_forward.1} parent=0 // pred_check_branch
    %15 = sbr.rel (0) target = $region9
  $region8: #{linear_decoder_forward.1} parent=0 // pred_region
    _
  $region9: #{linear_decoder_forward.1} parent=0 // pred_fallthru
    _
  // Predicated region
  $region10: #{linear_decoder_forward.1} parent=0 // pred_check
    _
  $region11: #{linear_decoder_forward.1} parent=0 // pred_check_branch
    %17 = sbr.rel (0) target = $region13
  $region12: #{linear_decoder_forward.1} parent=0 // pred_region
    _
  $region13: #{linear_decoder_forward.1} parent=0 // pred_fallthru
    _
  // Predicated region
  $region14: #{linear_decoder_forward.1} parent=0 // pred_check
    _
  $region15: #{linear_decoder_forward.1} parent=0 // pred_check_branch
    %19 = sbr.rel (0) target = $region17
  $region16: #{linear_decoder_forward.1} parent=0 // pred_region
    _
  $region17: #{linear_decoder_forward.1} parent=0 // pred_fallthru
    _
  // Predicated region
  $region18: #{linear_decoder_forward.1} parent=0 // pred_check
    _
  $region19: #{linear_decoder_forward.1} parent=0 // pred_check_branch
    %21 = sbr.rel (0) target = $region21
  $region20: #{linear_decoder_forward.1} parent=0 // pred_region
    _
  $region21: #{linear_decoder_forward.1} parent=0 // pred_fallthru
    _
  // Predicated region
  $region22: #{linear_decoder_forward.1} parent=0 // pred_check
    _
  $region23: #{linear_decoder_forward.1} parent=0 // pred_check_branch
    %23 = sbr.rel (0) target = $region25
  $region24: #{linear_decoder_forward.1} parent=0 // pred_region
    _
  $region25: #{linear_decoder_forward.1} parent=0 // pred_fallthru
    _
  // Predicated region
  $region26: #{linear_decoder_forward.1} parent=0 // pred_check
    _
  $region27: #{linear_decoder_forward.1} parent=0 // pred_check_branch
    %25 = sbr.rel (0) target = $region29
  $region28: #{linear_decoder_forward.1} parent=0 // pred_region
    _
  $region29: #{linear_decoder_forward.1} parent=0 // pred_fallthru
    _
  %v27 = vld [vmem:[%s0] sm:$0x3]
  %v28 = vpack.c.bf16 %v27, %v27
  %v29 = vld [vmem:[%s1] sm:$0x3]
  %v30 = vld [vmem:[%s2] sm:$0x1]
  %v32 = vlaneseq
  %v33 = vshrl.u32 %v32, 7
  %v34 = vsub.s32 0, %v33
  %v35 = vrot.slane %v30, %v34
  %vm37 = vcmask 23552
  %v39 = vsel %vm37, %v28, 0
  %vm41 = vcmask 1040384
  %vm42 = vcmask 1041408
  %v43 = vsel %vm41, 4294967295, 65535
  %v44 = vsel %vm42, %v43, 0
  %v46 = vand.u32 %v29, %v44
  %48 = vmatprep.subr.bf16.mxu0 0
  %49 = vmatpush1.bf16.msra.mxu0 0
  %50 = vmatprep.subr.bf16.mxu0 0
  %51 = vmatpush1.bf16.msra.mxu0 0
  %52 = vmatprep.subr.bf16.mxu0 0
  %53 = vmatpush1.bf16.msra.mxu0 0
  %54 = vmatprep.subr.bf16.mxu0 0
  %55 = vmatpush1.bf16.msra.mxu0 0
  %56 = vmatprep.subr.bf16.mxu0 0
  %57 = vmatpush1.bf16.msra.mxu0 0
  %58 = vmatprep.subr.bf16.mxu0 0
  %59 = vmatpush1.bf16.msra.mxu0 0
  %60 = vmatprep.subr.bf16.mxu0 0
  %61 = vmatpush1.bf16.msra.mxu0 0
  %62 = vmatprep.subr.bf16.mxu0 0
  %63 = vmatpush1.bf16.msra.mxu0 %v46
  %64 = vmatprep.subr.bf16.mxu0 0
  %65 = vmatpush2.bf16.msra.mxu0 0
  %66 = vmatprep.subr.bf16.mxu0 0
  %67 = vmatpush2.bf16.msra.mxu0 0
  %68 = vmatprep.subr.bf16.mxu0 0
  %69 = vmatpush2.bf16.msra.mxu0 0
  %70 = vmatprep.subr.bf16.mxu0 0
  %71 = vmatpush2.bf16.msra.mxu0 0
  %72 = vmatprep.subr.bf16.mxu0 0
  %73 = vmatpush2.bf16.msra.mxu0 0
  %74 = vmatprep.subr.bf16.mxu0 0
  %75 = vmatpush2.bf16.msra.mxu0 0
  %76 = vmatprep.subr.bf16.mxu0 0
  %77 = vmatpush2.bf16.msra.mxu0 0
  %78 = vmatprep.subr.bf16.mxu0 0
  %79 = vmatpush2.bf16.msra.mxu0 0
  %80 = vmatprep.mubr.bf16.mxu0 0
  %81 = vmatmul.mubr.bf16.gmra.mxu0 %v39
  %v82 = vpop.f32.mrf.mxu0
  %v83 = vadd.f32 %v35, %v82
  %v84 = vpop.f32.mrf.mxu0
  %v85 = vpop.f32.mrf.mxu0
  %v86 = vpop.f32.mrf.mxu0
  %87 = vdwg.mxu0
  %v88 = vmax.f32 %v83, 0.0
  %v89 = vpack.c.bf16 %v88, %v88
  %v90 = vld [vmem:[%s3] sm:$0xf]
  %v91 = vld [vmem:[%s3 + $0x4] sm:$0xf]
  %v92 = vld [vmem:[%s3 + $0x8] sm:$0xf]
  %v93 = vld [vmem:[%s3 + $0xc] sm:$0xf]
  %v94 = vld [vmem:[%s4] sm:$0x1]
  %v96 = vlaneseq
  %v97 = vshrl.u32 %v96, 7
  %v98 = vsub.s32 0, %v97
  %v99 = vrot.slane %v94, %v98
  %v105 = vunpack.c.l.b16 %v90
  %v106 = vunpack.c.l.b16 %v91
  %v107 = vunpack.c.l.b16 %v92
  %v108 = vunpack.c.l.b16 %v93
  %v109 = vpack.c.b16 %v106, %v105
  %v110 = vpack.c.b16 %v108, %v107
  %vm113 = vcmask 261120
  %v115 = vsel %vm113, %v89, 0
  %117 = vmatprep.subr.bf16.mxu0 0
  %118 = vmatpush1.bf16.msra.mxu0 0
  %119 = vmatprep.subr.bf16.mxu0 0
  %120 = vmatpush1.bf16.msra.mxu0 0
  %121 = vmatprep.subr.bf16.mxu0 0
  %122 = vmatpush1.bf16.msra.mxu0 0
  %123 = vmatprep.subr.bf16.mxu0 0
  %124 = vmatpush1.bf16.msra.mxu0 0
  %125 = vmatprep.subr.bf16.mxu0 0
  %126 = vmatpush1.bf16.msra.mxu0 0
  %127 = vmatprep.subr.bf16.mxu0 0
  %128 = vmatpush1.bf16.msra.mxu0 0
  %129 = vmatprep.subr.bf16.mxu0 0
  %130 = vmatpush1.bf16.msra.mxu0 %v110
  %131 = vmatprep.subr.bf16.mxu0 0
  %132 = vmatpush1.bf16.msra.mxu0 %v109
  %133 = vmatprep.subr.bf16.mxu0 0
  %134 = vmatpush2.bf16.msra.mxu0 0
  %135 = vmatprep.subr.bf16.mxu0 0
  %136 = vmatpush2.bf16.msra.mxu0 0
  %137 = vmatprep.subr.bf16.mxu0 0
  %138 = vmatpush2.bf16.msra.mxu0 0
  %139 = vmatprep.subr.bf16.mxu0 0
  %140 = vmatpush2.bf16.msra.mxu0 0
  %141 = vmatprep.subr.bf16.mxu0 0
  %142 = vmatpush2.bf16.msra.mxu0 0
  %143 = vmatprep.subr.bf16.mxu0 0
  %144 = vmatpush2.bf16.msra.mxu0 0
  %145 = vmatprep.subr.bf16.mxu0 0
  %146 = vmatpush2.bf16.msra.mxu0 0
  %147 = vmatprep.subr.bf16.mxu0 0
  %148 = vmatpush2.bf16.msra.mxu0 0
  %149 = vmatprep.mubr.bf16.mxu0 0
  %150 = vmatmul.mubr.bf16.gmra.mxu0 %v115
  %v151 = vpop.f32.mrf.mxu0
  %v152 = vadd.f32 %v99, %v151
  %v153 = vpop.f32.mrf.mxu0
  %v154 = vpop.f32.mrf.mxu0
  %v155 = vpop.f32.mrf.mxu0
  %156 = vdwg.mxu0
  %v157 = vmax.f32 %v152, 0.0
  %v158 = vpack.c.bf16 %v157, %v157
  %v159 = vld [vmem:[%s5] sm:$0xf]
  %v160 = vld [vmem:[%s5 + $0x4] sm:$0xf]
  %v161 = vld [vmem:[%s5 + $0x8] sm:$0xf]
  %v162 = vld [vmem:[%s5 + $0xc] sm:$0xf]
  %v163 = vld [vmem:[%s6] sm:$0x1]
  %v165 = vlaneseq
  %v166 = vshrl.u32 %v165, 7
  %v167 = vsub.s32 0, %v166
  %v168 = vrot.slane %v163, %v167
  %v174 = vunpack.c.l.b16 %v159
  %v175 = vunpack.c.l.b16 %v160
  %v176 = vunpack.c.l.b16 %v161
  %v177 = vunpack.c.l.b16 %v162
  %v178 = vpack.c.b16 %v175, %v174
  %v179 = vpack.c.b16 %v177, %v176
  %v183 = vsel %vm113, %v158, 0
  %185 = vmatprep.subr.bf16.mxu0 0
  %186 = vmatpush1.bf16.msra.mxu0 0
  %187 = vmatprep.subr.bf16.mxu0 0
  %188 = vmatpush1.bf16.msra.mxu0 0
  %189 = vmatprep.subr.bf16.mxu0 0
  %190 = vmatpush1.bf16.msra.mxu0 0
  %191 = vmatprep.subr.bf16.mxu0 0
  %192 = vmatpush1.bf16.msra.mxu0 0
  %193 = vmatprep.subr.bf16.mxu0 0
  %194 = vmatpush1.bf16.msra.mxu0 0
  %195 = vmatprep.subr.bf16.mxu0 0
  %196 = vmatpush1.bf16.msra.mxu0 0
  %197 = vmatprep.subr.bf16.mxu0 0
  %198 = vmatpush1.bf16.msra.mxu0 %v179
  %199 = vmatprep.subr.bf16.mxu0 0
  %200 = vmatpush1.bf16.msra.mxu0 %v178
  %201 = vmatprep.subr.bf16.mxu0 0
  %202 = vmatpush2.bf16.msra.mxu0 0
  %203 = vmatprep.subr.bf16.mxu0 0
  %204 = vmatpush2.bf16.msra.mxu0 0
  %205 = vmatprep.subr.bf16.mxu0 0
  %206 = vmatpush2.bf16.msra.mxu0 0
  %207 = vmatprep.subr.bf16.mxu0 0
  %208 = vmatpush2.bf16.msra.mxu0 0
  %209 = vmatprep.subr.bf16.mxu0 0
  %210 = vmatpush2.bf16.msra.mxu0 0
  %211 = vmatprep.subr.bf16.mxu0 0
  %212 = vmatpush2.bf16.msra.mxu0 0
  %213 = vmatprep.subr.bf16.mxu0 0
  %214 = vmatpush2.bf16.msra.mxu0 0
  %215 = vmatprep.subr.bf16.mxu0 0
  %216 = vmatpush2.bf16.msra.mxu0 0
  %217 = vmatprep.mubr.bf16.mxu0 0
  %218 = vmatmul.mubr.bf16.gmra.mxu0 %v183
  %v219 = vpop.f32.mrf.mxu0
  %v220 = vadd.f32 %v168, %v219
  %v221 = vpop.f32.mrf.mxu0
  %v222 = vpop.f32.mrf.mxu0
  %v223 = vpop.f32.mrf.mxu0
  %224 = vdwg.mxu0
  %225 = vst [vmem:[%s7] sm:$0x3] %v220
  // Predicated region
  $region30: #{linear_decoder_forward.1} parent=0 // pred_check
    _
  $region31: #{linear_decoder_forward.1} parent=0 // pred_check_branch
    %227 = sbr.rel (0) target = $region33
  $region32: #{linear_decoder_forward.1} parent=0 // pred_region
    _
  $region33: #{linear_decoder_forward.1} parent=0 // pred_fallthru
    _
  // Predicated region
  $region34: #{linear_decoder_forward.1} parent=0 // pred_check
    _
  $region35: #{linear_decoder_forward.1} parent=0 // pred_check_branch
    %229 = sbr.rel (0) target = $region37
  $region36: #{linear_decoder_forward.1} parent=0 // pred_region
    _
  $region37: #{linear_decoder_forward.1} parent=0 // pred_fallthru
    _

</llo_original>
